<compile_context>
chip_gen: v6e
topology: v6e:2x2x1
jax: 0.10.0
libtpu: 0.0.40
codegen_flags: <defaults>
</compile_context>

<pallas_src>
import functools

import jax
import jax.numpy as jnp
from jax.experimental import pallas as pl
from jax.experimental.pallas import tpu as pltpu


D_IN = 512
D_HID = 256
D_OUT = 512


def _round_up(x, m):
    return ((x + m - 1) // m) * m


def _cdiv(a, b):
    return -(-a // b)


def _elementwise_dtype():
    """bf16 elementwise on chips with bf16 VPU/EUP (v6e/v7x); f32 on v5e/older."""
    try:
        kind = jax.devices()[0].device_kind.lower()
    except Exception:
        return jnp.bfloat16
    if any(t in kind for t in ("v2", "v3", "v4", "v5 lite", "v5e", "v5lite")):
        return jnp.float32
    return jnp.bfloat16


def _gelu(x):
    # sigmoid-approx GELU: x * sigmoid(1.702*x) = 0.5*x + 0.5*x*tanh(0.851*x).
    # The only transcendental (tanh) runs on the EUP slot; ~4 VPU ops/element
    # vs ~8-9 for the tanh-polynomial form. Max abs deviation vs exact-erf
    # GELU is ~2e-2 (inference-grade).
    half_x = 0.5 * x
    return half_x * jnp.tanh(0.851 * x) + half_x


def umlp_kernel(x_ref, w1_ref, b1_ref, w2_ref, b2_ref, w3_ref, b3_ref, o_ref,
                *, ew_dtype):
    # bf16 MXU operands, f32 accumulation; elementwise math in ew_dtype.
    x = x_ref[...].astype(jnp.bfloat16)

    # linear512_256: Linear(512,256) + GELU
    h1 = jnp.dot(x, w1_ref[...], preferred_element_type=jnp.float32) + b1_ref[...]
    h1 = _gelu(h1.astype(ew_dtype))                 # kept for the residual

    # linear256_256: Linear(256,256) + GELU, then residual add
    h2 = jnp.dot(h1.astype(jnp.bfloat16), w2_ref[...],
                 preferred_element_type=jnp.float32) + b2_ref[...]
    h2 = _gelu(h2.astype(ew_dtype)) + h1

    # linear256_512: Linear(256,512) + GELU
    h3 = jnp.dot(h2.astype(jnp.bfloat16), w3_ref[...],
                 preferred_element_type=jnp.float32) + b3_ref[...]
    h3 = _gelu(h3.astype(ew_dtype))

    o_ref[...] = h3.astype(o_ref.dtype)


@functools.partial(jax.jit, static_argnames=("tm_max", "ew_dtype"))
def umlp_forward(x, w1, b1, w2, b2, w3, b3, *, tm_max=2048, ew_dtype=None):
    """x: [..., 512] -> [..., 512], output dtype matches x (bf16 in, bf16 out)."""
    if ew_dtype is None:
        ew_dtype = _elementwise_dtype()

    orig_shape = x.shape
    x2d = x.reshape(-1, D_IN)
    n = x2d.shape[0]

    # Row-tile alignment: (8,128) tiles for 4-byte dtypes, (16,128) for 2-byte.
    row_align = 8 if x2d.dtype.itemsize == 4 else 16

    # Smallest number of equal, aligned row blocks that covers n:
    #   * cap the block at tm_max rows (2048 keeps v7x's 64 MiB VMEM happy;
    #     v5e/v6e have 128 MiB and could take 4096),
    #   * force >=2 blocks when possible so v7x's two TensorCores both work,
    #   * pad only up to one row_align (8/16 rows) per block, not 256.
    n_min = _round_up(max(n, 1), row_align)
    g = _cdiv(n_min, tm_max)
    if g == 1 and n_min >= 2 * row_align:
        g = 2
    tm = _round_up(_cdiv(n_min, g), row_align)
    n_pad = g * tm
    if n_pad != n:
        x2d = jnp.pad(x2d, ((0, n_pad - n), (0, 0)))

    # Weights resident in VMEM as bf16 (halves weight DMA + VMEM footprint);
    # biases stay f32 and are added to the f32 MXU accumulator. (In a real
    # bf16 model the weights would already be stored bf16.)
    w1b, w2b, w3b = (w.astype(jnp.bfloat16) for w in (w1, w2, w3))
    b1f, b2f, b3f = (b.astype(jnp.float32).reshape(1, -1) for b in (b1, b2, b3))

    kernel = functools.partial(umlp_kernel, ew_dtype=ew_dtype)

    out = pl.pallas_call(
        kernel,
        out_shape=jax.ShapeDtypeStruct((n_pad, D_OUT), x.dtype),
        grid_spec=pltpu.PrefetchScalarGridSpec(
            num_scalar_prefetch=0,
            grid=(g,),
            in_specs=[
                pl.BlockSpec((tm, D_IN), lambda i: (i, 0)),       # x rows (streamed)
                # Weights/biases: constant block index -> fetched once and reused.
                pl.BlockSpec((D_IN, D_HID), lambda i: (0, 0)),    # W1 (bf16)
                pl.BlockSpec((1, D_HID), lambda i: (0, 0)),       # b1 (f32)
                pl.BlockSpec((D_HID, D_HID), lambda i: (0, 0)),   # W2 (bf16)
                pl.BlockSpec((1, D_HID), lambda i: (0, 0)),       # b2 (f32)
                pl.BlockSpec((D_HID, D_OUT), lambda i: (0, 0)),   # W3 (bf16)
                pl.BlockSpec((1, D_OUT), lambda i: (0, 0)),       # b3 (f32)
            ],
            out_specs=pl.BlockSpec((tm, D_OUT), lambda i: (i, 0)),
        ),
        compiler_params=pltpu.CompilerParams(
            dimension_semantics=("parallel",),
            vmem_limit_bytes=48 * 1024 * 1024,
        ),
    )(x2d, w1b, b1f, w2b, b2f, w3b, b3f)

    if n_pad != n:
        out = out[:n]
    return out.reshape(orig_shape[:-1] + (D_OUT,))


def init_params(key):
    """Deterministic init matching nn.Linear's uniform(-1/sqrt(fan_in), 1/sqrt(fan_in)).

    Weights are stored [C_in, C_out] (transposed vs. PyTorch's [out, in]) so the
    kernel computes y = x @ W + b directly on the MXU.
    """
    ks = jax.random.split(key, 6)

    def lin(kw, kb, fan_in, fan_out):
        bound = 1.0 / jnp.sqrt(fan_in)
        w = jax.random.uniform(kw, (fan_in, fan_out), jnp.float32, -bound, bound)
        b = jax.random.uniform(kb, (1, fan_out), jnp.float32, -bound, bound)
        return w, b

    w1, b1 = lin(ks[0], ks[1], D_IN, D_HID)
    w2, b2 = lin(ks[2], ks[3], D_HID, D_HID)
    w3, b3 = lin(ks[4], ks[5], D_HID, D_OUT)
    return w1, b1, w2, b2, w3, b3


def _gelu_exact(x):
    return 0.5 * x * (1.0 + jax.lax.erf(x / jnp.sqrt(2.0).astype(x.dtype)))


def umlp_reference(x, w1, b1, w2, b2, w3, b3):
    # Full-precision, exact-GELU reference matching the PyTorch module.
    h1 = _gelu_exact(x @ w1 + b1)
    h2 = _gelu_exact(h1 @ w2 + b2) + h1
    return _gelu_exact(h2 @ w3 + b3)


if __name__ == "__main__":
    key = jax.random.PRNGKey(0)
    kx, kp = jax.random.split(key)

    # batch=2, seq=8, features=512 (512 is fixed by the module's first Linear).
    # bf16 input simulates a bf16 producer, so the kernel streams bf16
    # activations in and out (the HBM-bound stream per the perf review).
    x = jax.random.normal(kx, (2, 8, D_IN), jnp.bfloat16)
    params = init_params(kp)

    out = umlp_forward(x, *params)
    out = jax.block_until_ready(out)

    assert out.shape == (2, 8, D_OUT)
    assert out.dtype == x.dtype

    ref = umlp_reference(x.astype(jnp.float32).reshape(-1, D_IN), *params)
    ref = ref.reshape(2, 8, D_OUT)
    out_f32 = out.astype(jnp.float32)
    # bf16 matmuls + bf16 activation I/O + sigmoid-approx GELU ->
    # inference-grade tolerance vs the f32 exact-erf reference.
    assert jnp.allclose(out_f32, ref, atol=7e-2, rtol=7e-2), float(
        jnp.max(jnp.abs(out_f32 - ref))
    )

    print("KERNEL_OK")
</pallas_src>

<mosaic_0001>
module attributes {stable_mosaic.version = 11 : i64} {
  func.func @umlp_kernel(%arg0: i32, %arg1: memref<16x512xbf16, #tpu.memory_space<vmem>>, %arg2: memref<512x256xbf16, #tpu.memory_space<vmem>>, %arg3: memref<1x256xf32, #tpu.memory_space<vmem>>, %arg4: memref<256x256xbf16, #tpu.memory_space<vmem>>, %arg5: memref<1x256xf32, #tpu.memory_space<vmem>>, %arg6: memref<256x512xbf16, #tpu.memory_space<vmem>>, %arg7: memref<1x512xf32, #tpu.memory_space<vmem>>, %arg8: memref<16x512xbf16, #tpu.memory_space<vmem>>) attributes {dimension_semantics = [#tpu.dimension_semantics<parallel>], iteration_bounds = array<i64: 1>, scalar_prefetch = 0 : i64, scratch_operands = 0 : i64, tpu.core_type = #tpu.core_type<tc>, window_params = [{transform_indices = @transform_0, window_bounds = array<i64: 16, 512>}, {pipeline_mode = #tpu.pipeline_mode<synchronous>, transform_indices = @transform_1, window_bounds = array<i64: 512, 256>}, {pipeline_mode = #tpu.pipeline_mode<synchronous>, transform_indices = @transform_2, window_bounds = array<i64: 1, 256>}, {pipeline_mode = #tpu.pipeline_mode<synchronous>, transform_indices = @transform_3, window_bounds = array<i64: 256, 256>}, {pipeline_mode = #tpu.pipeline_mode<synchronous>, transform_indices = @transform_4, window_bounds = array<i64: 1, 256>}, {pipeline_mode = #tpu.pipeline_mode<synchronous>, transform_indices = @transform_5, window_bounds = array<i64: 256, 512>}, {pipeline_mode = #tpu.pipeline_mode<synchronous>, transform_indices = @transform_6, window_bounds = array<i64: 1, 512>}, {transform_indices = @transform_7, window_bounds = array<i64: 16, 512>}]} {
    %c0 = arith.constant 0 : index
    %c0_0 = arith.constant 0 : index
    %0 = vector.load %arg1[%c0, %c0_0] : memref<16x512xbf16, #tpu.memory_space<vmem>>, vector<16x512xbf16>
    %c0_1 = arith.constant 0 : index
    %c0_2 = arith.constant 0 : index
    %1 = vector.load %arg2[%c0_1, %c0_2] : memref<512x256xbf16, #tpu.memory_space<vmem>>, vector<512x256xbf16>
    %cst = arith.constant dense<0.000000e+00> : vector<16x256xf32>
    %2 = tpu.matmul %0, %1, %cst {dimension_numbers = #tpu.dot_dimension_numbers<[1], [0], [0], [1], [0, 0, 1, 1], [], []>} : vector<16x512xbf16>, vector<512x256xbf16>, vector<16x256xf32> -> vector<16x256xf32>
    %c0_3 = arith.constant 0 : index
    %c0_4 = arith.constant 0 : index
    %3 = vector.load %arg3[%c0_3, %c0_4] : memref<1x256xf32, #tpu.memory_space<vmem>>, vector<1x256xf32>
    %4 = vector.broadcast %3 : vector<1x256xf32> to vector<16x256xf32>
    %5 = arith.addf %2, %4 : vector<16x256xf32>
    %6 = arith.truncf %5 : vector<16x256xf32> to vector<16x256xbf16>
    %cst_5 = arith.constant 5.000000e-01 : bf16
    %7 = vector.broadcast %cst_5 : bf16 to vector<16x256xbf16>
    %8 = arith.mulf %7, %6 : vector<16x256xbf16>
    %cst_6 = arith.constant 8.515620e-01 : bf16
    %9 = vector.broadcast %cst_6 : bf16 to vector<16x256xbf16>
    %10 = arith.mulf %9, %6 : vector<16x256xbf16>
    %11 = math.tanh %10 : vector<16x256xbf16>
    %12 = arith.mulf %8, %11 : vector<16x256xbf16>
    %13 = arith.addf %12, %8 : vector<16x256xbf16>
    %c0_7 = arith.constant 0 : index
    %c0_8 = arith.constant 0 : index
    %14 = vector.load %arg4[%c0_7, %c0_8] : memref<256x256xbf16, #tpu.memory_space<vmem>>, vector<256x256xbf16>
    %cst_9 = arith.constant dense<0.000000e+00> : vector<16x256xf32>
    %15 = tpu.matmul %13, %14, %cst_9 {dimension_numbers = #tpu.dot_dimension_numbers<[1], [0], [0], [1], [0, 0, 1, 1], [], []>} : vector<16x256xbf16>, vector<256x256xbf16>, vector<16x256xf32> -> vector<16x256xf32>
    %c0_10 = arith.constant 0 : index
    %c0_11 = arith.constant 0 : index
    %16 = vector.load %arg5[%c0_10, %c0_11] : memref<1x256xf32, #tpu.memory_space<vmem>>, vector<1x256xf32>
    %17 = vector.broadcast %16 : vector<1x256xf32> to vector<16x256xf32>
    %18 = arith.addf %15, %17 : vector<16x256xf32>
    %19 = arith.truncf %18 : vector<16x256xf32> to vector<16x256xbf16>
    %cst_12 = arith.constant 5.000000e-01 : bf16
    %20 = vector.broadcast %cst_12 : bf16 to vector<16x256xbf16>
    %21 = arith.mulf %20, %19 : vector<16x256xbf16>
    %cst_13 = arith.constant 8.515620e-01 : bf16
    %22 = vector.broadcast %cst_13 : bf16 to vector<16x256xbf16>
    %23 = arith.mulf %22, %19 : vector<16x256xbf16>
    %24 = math.tanh %23 : vector<16x256xbf16>
    %25 = arith.mulf %21, %24 : vector<16x256xbf16>
    %26 = arith.addf %25, %21 : vector<16x256xbf16>
    %27 = arith.addf %26, %13 : vector<16x256xbf16>
    %c0_14 = arith.constant 0 : index
    %c0_15 = arith.constant 0 : index
    %28 = vector.load %arg6[%c0_14, %c0_15] : memref<256x512xbf16, #tpu.memory_space<vmem>>, vector<256x512xbf16>
    %cst_16 = arith.constant dense<0.000000e+00> : vector<16x512xf32>
    %29 = tpu.matmul %27, %28, %cst_16 {dimension_numbers = #tpu.dot_dimension_numbers<[1], [0], [0], [1], [0, 0, 1, 1], [], []>} : vector<16x256xbf16>, vector<256x512xbf16>, vector<16x512xf32> -> vector<16x512xf32>
    %c0_17 = arith.constant 0 : index
    %c0_18 = arith.constant 0 : index
    %30 = vector.load %arg7[%c0_17, %c0_18] : memref<1x512xf32, #tpu.memory_space<vmem>>, vector<1x512xf32>
    %31 = vector.broadcast %30 : vector<1x512xf32> to vector<16x512xf32>
    %32 = arith.addf %29, %31 : vector<16x512xf32>
    %33 = arith.truncf %32 : vector<16x512xf32> to vector<16x512xbf16>
    %cst_19 = arith.constant 5.000000e-01 : bf16
    %34 = vector.broadcast %cst_19 : bf16 to vector<16x512xbf16>
    %35 = arith.mulf %34, %33 : vector<16x512xbf16>
    %cst_20 = arith.constant 8.515620e-01 : bf16
    %36 = vector.broadcast %cst_20 : bf16 to vector<16x512xbf16>
    %37 = arith.mulf %36, %33 : vector<16x512xbf16>
    %38 = math.tanh %37 : vector<16x512xbf16>
    %39 = arith.mulf %35, %38 : vector<16x512xbf16>
    %40 = arith.addf %39, %35 : vector<16x512xbf16>
    %c0_21 = arith.constant 0 : index
    %c0_22 = arith.constant 0 : index
    %41 = vector.load %arg8[%c0_21, %c0_22] : memref<16x512xbf16, #tpu.memory_space<vmem>>, vector<16x512xbf16>
    tpu.vector_store %arg8[%c0_21, %c0_22], %40 {strides = array<i32>} : memref<16x512xbf16, #tpu.memory_space<vmem>>, vector<16x512xbf16>,
    return
  }
  func.func @transform_0(%arg0: i32) -> (i32, i32) {
    %c0_i32 = arith.constant 0 : i32
    %c0_i32_0 = arith.constant 0 : i32
    return %arg0, %c0_i32 : i32, i32
  }
  func.func @transform_1(%arg0: i32) -> (i32, i32) {
    %c0_i32 = arith.constant 0 : i32
    %c0_i32_0 = arith.constant 0 : i32
    %c0_i32_1 = arith.constant 0 : i32
    return %c0_i32, %c0_i32_0 : i32, i32
  }
  func.func @transform_2(%arg0: i32) -> (i32, i32) {
    %c0_i32 = arith.constant 0 : i32
    %c0_i32_0 = arith.constant 0 : i32
    %c0_i32_1 = arith.constant 0 : i32
    return %c0_i32, %c0_i32_0 : i32, i32
  }
  func.func @transform_3(%arg0: i32) -> (i32, i32) {
    %c0_i32 = arith.constant 0 : i32
    %c0_i32_0 = arith.constant 0 : i32
    %c0_i32_1 = arith.constant 0 : i32
    return %c0_i32, %c0_i32_0 : i32, i32
  }
  func.func @transform_4(%arg0: i32) -> (i32, i32) {
    %c0_i32 = arith.constant 0 : i32
    %c0_i32_0 = arith.constant 0 : i32
    %c0_i32_1 = arith.constant 0 : i32
    return %c0_i32, %c0_i32_0 : i32, i32
  }
  func.func @transform_5(%arg0: i32) -> (i32, i32) {
    %c0_i32 = arith.constant 0 : i32
    %c0_i32_0 = arith.constant 0 : i32
    %c0_i32_1 = arith.constant 0 : i32
    return %c0_i32, %c0_i32_0 : i32, i32
  }
  func.func @transform_6(%arg0: i32) -> (i32, i32) {
    %c0_i32 = arith.constant 0 : i32
    %c0_i32_0 = arith.constant 0 : i32
    %c0_i32_1 = arith.constant 0 : i32
    return %c0_i32, %c0_i32_0 : i32, i32
  }
  func.func @transform_7(%arg0: i32) -> (i32, i32) {
    %c0_i32 = arith.constant 0 : i32
    %c0_i32_0 = arith.constant 0 : i32
    return %arg0, %c0_i32 : i32, i32
  }
}

</mosaic_0001>

<llo_original>
// kernel: umlp_forward.1
$region0: #{umlp_forward.1}
  #allocation0 [shape = 'u32[]', space=smem, size = 0x4, offset = 0x4, fixed_abs, tag = 'smem constant byte address 0x4 - core index']
  #allocation1 [shape = 'u32[144,128]{1,0:T(1,128)}', space=vmem, size = 0x12000, scoped, tag = 'internal scratch']
  %s0 = inlined_call_operand.vmem [shape: bf16[16,512], index: 0, kind: input, shape index: {}]
  %s1 = inlined_call_operand.vmem [shape: bf16[512,256], index: 1, kind: input, shape index: {}]
  %s2 = inlined_call_operand.vmem [shape: f32[1,256], index: 2, kind: input, shape index: {}]
  %s3 = inlined_call_operand.vmem [shape: bf16[256,256], index: 3, kind: input, shape index: {}]
  %s4 = inlined_call_operand.vmem [shape: f32[1,256], index: 4, kind: input, shape index: {}]
  %s5 = inlined_call_operand.vmem [shape: bf16[256,512], index: 5, kind: input, shape index: {}]
  %s6 = inlined_call_operand.vmem [shape: f32[1,512], index: 6, kind: input, shape index: {}]
  %s7 = inlined_call_operand.hbm [shape: bf16[16,512], index: 7, kind: output, shape index: {}]
  %s8 = sld [smem:[#allocation0]]
  $region38: #{umlp_forward.1} parent=0
    _
  %s10 = ssub.s32 1, %s8
  %s11 = scalar_select 0, %s10, %s8
  $region1: #{umlp_forward.1} parent=0
    #allocation2 [shape = 'u8[16384]{0}', space=vmem, size = 0x4000, scoped, tag = 'output window, operand 0, single buffered']
    #allocation3 [shape = 's32[1]{0}', space=sflag, size = 0x4, scoped, tag = 'scoped memory for umlp_forward.1']
    %12 = vsyncpa [#allocation3], 0
    // Predicated region
    $region2: #{umlp_forward.1} parent=1 // pred_check
      _
    $region3: #{umlp_forward.1} parent=1 // pred_check_branch
      %14 = sbr.rel (0) target = $region5
    $region4: #{umlp_forward.1} parent=1 // pred_region
      _
    $region5: #{umlp_forward.1} parent=1 // pred_fallthru
      _
    // Predicated region
    $region6: #{umlp_forward.1} parent=1 // pred_check
      _
    $region7: #{umlp_forward.1} parent=1 // pred_check_branch
      %16 = sbr.rel (0) target = $region9
    $region8: #{umlp_forward.1} parent=1 // pred_region
      _
    $region9: #{umlp_forward.1} parent=1 // pred_fallthru
      _
    // Predicated region
    $region10: #{umlp_forward.1} parent=1 // pred_check
      _
    $region11: #{umlp_forward.1} parent=1 // pred_check_branch
      %18 = sbr.rel (0) target = $region13
    $region12: #{umlp_forward.1} parent=1 // pred_region
      _
    $region13: #{umlp_forward.1} parent=1 // pred_fallthru
      _
    // Predicated region
    $region14: #{umlp_forward.1} parent=1 // pred_check
      _
    $region15: #{umlp_forward.1} parent=1 // pred_check_branch
      %20 = sbr.rel (0) target = $region17
    $region16: #{umlp_forward.1} parent=1 // pred_region
      _
    $region17: #{umlp_forward.1} parent=1 // pred_fallthru
      _
    // Predicated region
    $region18: #{umlp_forward.1} parent=1 // pred_check
      _
    $region19: #{umlp_forward.1} parent=1 // pred_check_branch
      %22 = sbr.rel (0) target = $region21
    $region20: #{umlp_forward.1} parent=1 // pred_region
      _
    $region21: #{umlp_forward.1} parent=1 // pred_fallthru
      _
    // Predicated region
    $region22: #{umlp_forward.1} parent=1 // pred_check
      _
    $region23: #{umlp_forward.1} parent=1 // pred_check_branch
      %24 = sbr.rel (0) target = $region25
    $region24: #{umlp_forward.1} parent=1 // pred_region
      _
    $region25: #{umlp_forward.1} parent=1 // pred_fallthru
      _
    // Predicated region
    $region26: #{umlp_forward.1} parent=1 // pred_check
      _
    $region27: #{umlp_forward.1} parent=1 // pred_check_branch
      %26 = sbr.rel (0) target = $region29
    $region28: #{umlp_forward.1} parent=1 // pred_region
      _
    $region29: #{umlp_forward.1} parent=1 // pred_fallthru
      _
    %v29 = vld [vmem:[%s0] sm:$0xff]
    %v30 = vld [vmem:[%s0 + $0x8] sm:$0xff]
    %v31 = vld [vmem:[%s0 + $0x10] sm:$0xff]
    %v32 = vld [vmem:[%s0 + $0x18] sm:$0xff]
    %v33 = vld [vmem:[%s1] sm:$0xff]
    %v34 = vld [vmem:[%s1 + $0x8] sm:$0xff]
    %v35 = vld [vmem:[%s1 + $0x10] sm:$0xff]
    %v36 = vld [vmem:[%s1 + $0x18] sm:$0xff]
    %v37 = vld [vmem:[%s1 + $0x20] sm:$0xff]
    %v38 = vld [vmem:[%s1 + $0x28] sm:$0xff]
    %v39 = vld [vmem:[%s1 + $0x30] sm:$0xff]
    %v40 = vld [vmem:[%s1 + $0x38] sm:$0xff]
    %v41 = vld [vmem:[%s1 + $0x40] sm:$0xff]
    %v42 = vld [vmem:[%s1 + $0x48] sm:$0xff]
    %v43 = vld [vmem:[%s1 + $0x50] sm:$0xff]
    %v44 = vld [vmem:[%s1 + $0x58] sm:$0xff]
    %v45 = vld [vmem:[%s1 + $0x60] sm:$0xff]
    %v46 = vld [vmem:[%s1 + $0x68] sm:$0xff]
    %v47 = vld [vmem:[%s1 + $0x70] sm:$0xff]
    %v48 = vld [vmem:[%s1 + $0x78] sm:$0xff]
    %v49 = vld [vmem:[%s1 + $0x80] sm:$0xff]
    %v50 = vld [vmem:[%s1 + $0x88] sm:$0xff]
    %v51 = vld [vmem:[%s1 + $0x90] sm:$0xff]
    %v52 = vld [vmem:[%s1 + $0x98] sm:$0xff]
    %v53 = vld [vmem:[%s1 + $0xa0] sm:$0xff]
    %v54 = vld [vmem:[%s1 + $0xa8] sm:$0xff]
    %v55 = vld [vmem:[%s1 + $0xb0] sm:$0xff]
    %v56 = vld [vmem:[%s1 + $0xb8] sm:$0xff]
    %v57 = vld [vmem:[%s1 + $0xc0] sm:$0xff]
    %v58 = vld [vmem:[%s1 + $0xc8] sm:$0xff]
    %v59 = vld [vmem:[%s1 + $0xd0] sm:$0xff]
    %v60 = vld [vmem:[%s1 + $0xd8] sm:$0xff]
    %v61 = vld [vmem:[%s1 + $0xe0] sm:$0xff]
    %v62 = vld [vmem:[%s1 + $0xe8] sm:$0xff]
    %v63 = vld [vmem:[%s1 + $0xf0] sm:$0xff]
    %v64 = vld [vmem:[%s1 + $0xf8] sm:$0xff]
    %v65 = vld [vmem:[%s1 + $0x100] sm:$0xff]
    %v66 = vld [vmem:[%s1 + $0x108] sm:$0xff]
    %v67 = vld [vmem:[%s1 + $0x110] sm:$0xff]
    %v68 = vld [vmem:[%s1 + $0x118] sm:$0xff]
    %v69 = vld [vmem:[%s1 + $0x120] sm:$0xff]
    %v70 = vld [vmem:[%s1 + $0x128] sm:$0xff]
    %v71 = vld [vmem:[%s1 + $0x130] sm:$0xff]
    %v72 = vld [vmem:[%s1 + $0x138] sm:$0xff]
    %v73 = vld [vmem:[%s1 + $0x140] sm:$0xff]
    %v74 = vld [vmem:[%s1 + $0x148] sm:$0xff]
    %v75 = vld [vmem:[%s1 + $0x150] sm:$0xff]
    %v76 = vld [vmem:[%s1 + $0x158] sm:$0xff]
    %v77 = vld [vmem:[%s1 + $0x160] sm:$0xff]
    %v78 = vld [vmem:[%s1 + $0x168] sm:$0xff]
    %v79 = vld [vmem:[%s1 + $0x170] sm:$0xff]
    %v80 = vld [vmem:[%s1 + $0x178] sm:$0xff]
    %v81 = vld [vmem:[%s1 + $0x180] sm:$0xff]
    %v82 = vld [vmem:[%s1 + $0x188] sm:$0xff]
    %v83 = vld [vmem:[%s1 + $0x190] sm:$0xff]
    %v84 = vld [vmem:[%s1 + $0x198] sm:$0xff]
    %v85 = vld [vmem:[%s1 + $0x1a0] sm:$0xff]
    %v86 = vld [vmem:[%s1 + $0x1a8] sm:$0xff]
    %v87 = vld [vmem:[%s1 + $0x1b0] sm:$0xff]
    %v88 = vld [vmem:[%s1 + $0x1b8] sm:$0xff]
    %v89 = vld [vmem:[%s1 + $0x1c0] sm:$0xff]
    %v90 = vld [vmem:[%s1 + $0x1c8] sm:$0xff]
    %v91 = vld [vmem:[%s1 + $0x1d0] sm:$0xff]
    %v92 = vld [vmem:[%s1 + $0x1d8] sm:$0xff]
    %v93 = vld [vmem:[%s1 + $0x1e0] sm:$0xff]
    %v94 = vld [vmem:[%s1 + $0x1e8] sm:$0xff]
    %v95 = vld [vmem:[%s1 + $0x1f0] sm:$0xff]
    %v96 = vld [vmem:[%s1 + $0x1f8] sm:$0xff]
    %v97 = vld [vmem:[%s2] sm:$0x3]
    %v99 = vlaneseq
    %v100 = vshrl.u32 %v99, 7
    %v101 = vsub.s32 0, %v100
    %v102 = vrot.slane %v97, %v101
    %v103 = vlaneseq
    %v104 = vshrl.u32 %v103, 7
    %v105 = vsub.s32 1, %v104
    %v106 = vrot.slane %v97, %v105
    %v113 = vunpack.c.l.b16 %v29
    %v114 = vunpack.c.h.b16 %v29
    %v115 = vunpack.c.l.b16 %v30
    %v116 = vunpack.c.h.b16 %v30
    %v117 = vunpack.c.l.b16 %v31
    %v118 = vunpack.c.h.b16 %v31
    %v119 = vunpack.c.l.b16 %v32
    %v120 = vunpack.c.h.b16 %v32
    %v121 = vpack.c.b16 %v117, %v113
    %v122 = vpack.c.b16 %v118, %v114
    %v123 = vpack.c.b16 %v119, %v115
    %v124 = vpack.c.b16 %v120, %v116
    %v193 = vunpack.c.l.b16 %v33
    %v194 = vunpack.c.h.b16 %v33
    %v195 = vunpack.c.l.b16 %v34
    %v196 = vunpack.c.h.b16 %v34
    %v197 = vunpack.c.l.b16 %v35
    %v198 = vunpack.c.h.b16 %v35
    %v199 = vunpack.c.l.b16 %v36
    %v200 = vunpack.c.h.b16 %v36
    %v201 = vunpack.c.l.b16 %v37
    %v202 = vunpack.c.h.b16 %v37
    %v203 = vunpack.c.l.b16 %v38
    %v204 = vunpack.c.h.b16 %v38
    %v205 = vunpack.c.l.b16 %v39
    %v206 = vunpack.c.h.b16 %v39
    %v207 = vunpack.c.l.b16 %v40
    %v208 = vunpack.c.h.b16 %v40
    %v209 = vunpack.c.l.b16 %v41
    %v210 = vunpack.c.h.b16 %v41
    %v211 = vunpack.c.l.b16 %v42
    %v212 = vunpack.c.h.b16 %v42
    %v213 = vunpack.c.l.b16 %v43
    %v214 = vunpack.c.h.b16 %v43
    %v215 = vunpack.c.l.b16 %v44
    %v216 = vunpack.c.h.b16 %v44
    %v217 = vunpack.c.l.b16 %v45
    %v218 = vunpack.c.h.b16 %v45
    %v219 = vunpack.c.l.b16 %v46
    %v220 = vunpack.c.h.b16 %v46
    %v221 = vunpack.c.l.b16 %v47
    %v222 = vunpack.c.h.b16 %v47
    %v223 = vunpack.c.l.b16 %v48
    %v224 = vunpack.c.h.b16 %v48
    %v225 = vunpack.c.l.b16 %v49
    %v226 = vunpack.c.h.b16 %v49
    %v227 = vunpack.c.l.b16 %v50
    %v228 = vunpack.c.h.b16 %v50
    %v229 = vunpack.c.l.b16 %v51
    %v230 = vunpack.c.h.b16 %v51
    %v231 = vunpack.c.l.b16 %v52
    %v232 = vunpack.c.h.b16 %v52
    %v233 = vunpack.c.l.b16 %v53
    %v234 = vunpack.c.h.b16 %v53
    %v235 = vunpack.c.l.b16 %v54
    %v236 = vunpack.c.h.b16 %v54
    %v237 = vunpack.c.l.b16 %v55
    %v238 = vunpack.c.h.b16 %v55
    %v239 = vunpack.c.l.b16 %v56
    %v240 = vunpack.c.h.b16 %v56
    %v241 = vunpack.c.l.b16 %v57
    %v242 = vunpack.c.h.b16 %v57
    %v243 = vunpack.c.l.b16 %v58
    %v244 = vunpack.c.h.b16 %v58
    %v245 = vunpack.c.l.b16 %v59
    %v246 = vunpack.c.h.b16 %v59
    %v247 = vunpack.c.l.b16 %v60
    %v248 = vunpack.c.h.b16 %v60
    %v249 = vunpack.c.l.b16 %v61
    %v250 = vunpack.c.h.b16 %v61
    %v251 = vunpack.c.l.b16 %v62
    %v252 = vunpack.c.h.b16 %v62
    %v253 = vunpack.c.l.b16 %v63
    %v254 = vunpack.c.h.b16 %v63
    %v255 = vunpack.c.l.b16 %v64
    %v256 = vunpack.c.h.b16 %v64
    %v257 = vunpack.c.l.b16 %v65
    %v258 = vunpack.c.h.b16 %v65
    %v259 = vunpack.c.l.b16 %v66
    %v260 = vunpack.c.h.b16 %v66
    %v261 = vunpack.c.l.b16 %v67
    %v262 = vunpack.c.h.b16 %v67
    %v263 = vunpack.c.l.b16 %v68
    %v264 = vunpack.c.h.b16 %v68
    %v265 = vunpack.c.l.b16 %v69
    %v266 = vunpack.c.h.b16 %v69
    %v267 = vunpack.c.l.b16 %v70
    %v268 = vunpack.c.h.b16 %v70
    %v269 = vunpack.c.l.b16 %v71
    %v270 = vunpack.c.h.b16 %v71
    %v271 = vunpack.c.l.b16 %v72
    %v272 = vunpack.c.h.b16 %v72
    %v273 = vunpack.c.l.b16 %v73
    %v274 = vunpack.c.h.b16 %v73
    %v275 = vunpack.c.l.b16 %v74
    %v276 = vunpack.c.h.b16 %v74
    %v277 = vunpack.c.l.b16 %v75
    %v278 = vunpack.c.h.b16 %v75
    %v279 = vunpack.c.l.b16 %v76
    %v280 = vunpack.c.h.b16 %v76
    %v281 = vunpack.c.l.b16 %v77
    %v282 = vunpack.c.h.b16 %v77
    %v283 = vunpack.c.l.b16 %v78
    %v284 = vunpack.c.h.b16 %v78
    %v285 = vunpack.c.l.b16 %v79
    %v286 = vunpack.c.h.b16 %v79
    %v287 = vunpack.c.l.b16 %v80
    %v288 = vunpack.c.h.b16 %v80
    %v289 = vunpack.c.l.b16 %v81
    %v290 = vunpack.c.h.b16 %v81
    %v291 = vunpack.c.l.b16 %v82
    %v292 = vunpack.c.h.b16 %v82
    %v293 = vunpack.c.l.b16 %v83
    %v294 = vunpack.c.h.b16 %v83
    %v295 = vunpack.c.l.b16 %v84
    %v296 = vunpack.c.h.b16 %v84
    %v297 = vunpack.c.l.b16 %v85
    %v298 = vunpack.c.h.b16 %v85
    %v299 = vunpack.c.l.b16 %v86
    %v300 = vunpack.c.h.b16 %v86
    %v301 = vunpack.c.l.b16 %v87
    %v302 = vunpack.c.h.b16 %v87
    %v303 = vunpack.c.l.b16 %v88
    %v304 = vunpack.c.h.b16 %v88
    %v305 = vunpack.c.l.b16 %v89
    %v306 = vunpack.c.h.b16 %v89
    %v307 = vunpack.c.l.b16 %v90
    %v308 = vunpack.c.h.b16 %v90
    %v309 = vunpack.c.l.b16 %v91
    %v310 = vunpack.c.h.b16 %v91
    %v311 = vunpack.c.l.b16 %v92
    %v312 = vunpack.c.h.b16 %v92
    %v313 = vunpack.c.l.b16 %v93
    %v314 = vunpack.c.h.b16 %v93
    %v315 = vunpack.c.l.b16 %v94
    %v316 = vunpack.c.h.b16 %v94
    %v317 = vunpack.c.l.b16 %v95
    %v318 = vunpack.c.h.b16 %v95
    %v319 = vunpack.c.l.b16 %v96
    %v320 = vunpack.c.h.b16 %v96
    %v321 = vpack.c.b16 %v195, %v193
    %v322 = vpack.c.b16 %v196, %v194
    %v323 = vpack.c.b16 %v199, %v197
    %v324 = vpack.c.b16 %v200, %v198
    %v325 = vpack.c.b16 %v203, %v201
    %v326 = vpack.c.b16 %v204, %v202
    %v327 = vpack.c.b16 %v207, %v205
    %v328 = vpack.c.b16 %v208, %v206
    %v329 = vpack.c.b16 %v211, %v209
    %v330 = vpack.c.b16 %v212, %v210
    %v331 = vpack.c.b16 %v215, %v213
    %v332 = vpack.c.b16 %v216, %v214
    %v333 = vpack.c.b16 %v219, %v217
    %v334 = vpack.c.b16 %v220, %v218
    %v335 = vpack.c.b16 %v223, %v221
    %v336 = vpack.c.b16 %v224, %v222
    %v337 = vpack.c.b16 %v227, %v225
    %v338 = vpack.c.b16 %v228, %v226
    %v339 = vpack.c.b16 %v231, %v229
    %v340 = vpack.c.b16 %v232, %v230
    %v341 = vpack.c.b16 %v235, %v233
    %v342 = vpack.c.b16 %v236, %v234
    %v343 = vpack.c.b16 %v239, %v237
    %v344 = vpack.c.b16 %v240, %v238
    %v345 = vpack.c.b16 %v243, %v241
    %v346 = vpack.c.b16 %v244, %v242
    %v347 = vpack.c.b16 %v247, %v245
    %v348 = vpack.c.b16 %v248, %v246
    %v349 = vpack.c.b16 %v251, %v249
    %v350 = vpack.c.b16 %v252, %v250
    %v351 = vpack.c.b16 %v255, %v253
    %v352 = vpack.c.b16 %v256, %v254
    %v353 = vpack.c.b16 %v259, %v257
    %v354 = vpack.c.b16 %v260, %v258
    %v355 = vpack.c.b16 %v263, %v261
    %v356 = vpack.c.b16 %v264, %v262
    %v357 = vpack.c.b16 %v267, %v265
    %v358 = vpack.c.b16 %v268, %v266
    %v359 = vpack.c.b16 %v271, %v269
    %v360 = vpack.c.b16 %v272, %v270
    %v361 = vpack.c.b16 %v275, %v273
    %v362 = vpack.c.b16 %v276, %v274
    %v363 = vpack.c.b16 %v279, %v277
    %v364 = vpack.c.b16 %v280, %v278
    %v365 = vpack.c.b16 %v283, %v281
    %v366 = vpack.c.b16 %v284, %v282
    %v367 = vpack.c.b16 %v287, %v285
    %v368 = vpack.c.b16 %v288, %v286
    %v369 = vpack.c.b16 %v291, %v289
    %v370 = vpack.c.b16 %v292, %v290
    %v371 = vpack.c.b16 %v295, %v293
    %v372 = vpack.c.b16 %v296, %v294
    %v373 = vpack.c.b16 %v299, %v297
    %v374 = vpack.c.b16 %v300, %v298
    %v375 = vpack.c.b16 %v303, %v301
    %v376 = vpack.c.b16 %v304, %v302
    %v377 = vpack.c.b16 %v307, %v305
    %v378 = vpack.c.b16 %v308, %v306
    %v379 = vpack.c.b16 %v311, %v309
    %v380 = vpack.c.b16 %v312, %v310
    %v381 = vpack.c.b16 %v315, %v313
    %v382 = vpack.c.b16 %v316, %v314
    %v383 = vpack.c.b16 %v319, %v317
    %v384 = vpack.c.b16 %v320, %v318
    %449 = vmatprep.subr.bf16.mxu0 %v336
    %450 = vmatpush1.bf16.msra.mxu0 %v335
    %451 = vmatprep.subr.bf16.mxu0 %v334
    %452 = vmatpush1.bf16.msra.mxu0 %v333
    %453 = vmatprep.subr.bf16.mxu0 %v332
    %454 = vmatpush1.bf16.msra.mxu0 %v331
    %455 = vmatprep.subr.bf16.mxu0 %v330
    %456 = vmatpush1.bf16.msra.mxu0 %v329
    %457 = vmatprep.subr.bf16.mxu0 %v328
    %458 = vmatpush1.bf16.msra.mxu0 %v327
    %459 = vmatprep.subr.bf16.mxu0 %v326
    %460 = vmatpush1.bf16.msra.mxu0 %v325
    %461 = vmatprep.subr.bf16.mxu0 %v324
    %462 = vmatpush1.bf16.msra.mxu0 %v323
    %463 = vmatprep.subr.bf16.mxu0 %v322
    %464 = vmatpush1.bf16.msra.mxu0 %v321
    %465 = vmatprep.subr.bf16.mxu0 %v352
    %466 = vmatpush2.bf16.msra.mxu0 %v351
    %467 = vmatprep.subr.bf16.mxu0 %v350
    %468 = vmatpush2.bf16.msra.mxu0 %v349
    %469 = vmatprep.subr.bf16.mxu0 %v348
    %470 = vmatpush2.bf16.msra.mxu0 %v347
    %471 = vmatprep.subr.bf16.mxu0 %v346
    %472 = vmatpush2.bf16.msra.mxu0 %v345
    %473 = vmatprep.subr.bf16.mxu0 %v344
    %474 = vmatpush2.bf16.msra.mxu0 %v343
    %475 = vmatprep.subr.bf16.mxu0 %v342
    %476 = vmatpush2.bf16.msra.mxu0 %v341
    %477 = vmatprep.subr.bf16.mxu0 %v340
    %478 = vmatpush2.bf16.msra.mxu0 %v339
    %479 = vmatprep.subr.bf16.mxu0 %v338
    %480 = vmatpush2.bf16.msra.mxu0 %v337
    %481 = vmatprep.mubr.bf16.mxu0 %v122
    %482 = vmatmul.mubr.bf16.gmra.mxu0 %v121
    %v483 = vpop.f32.mrf.mxu0
    %v484 = vadd.f32 %v102, %v483
    %v485 = vpop.f32.mrf.mxu0
    %v486 = vadd.f32 %v106, %v485
    %v487 = vpop.f32.mrf.mxu0
    %v488 = vadd.f32 %v102, %v487
    %v489 = vpop.f32.mrf.mxu0
    %v490 = vadd.f32 %v106, %v489
    %491 = vdwg.mxu0
    %492 = vmatprep.subr.bf16.mxu0 %v368
    %493 = vmatpush1.bf16.msra.mxu0 %v367
    %494 = vmatprep.subr.bf16.mxu0 %v366
    %495 = vmatpush1.bf16.msra.mxu0 %v365
    %496 = vmatprep.subr.bf16.mxu0 %v364
    %497 = vmatpush1.bf16.msra.mxu0 %v363
    %498 = vmatprep.subr.bf16.mxu0 %v362
    %499 = vmatpush1.bf16.msra.mxu0 %v361
    %500 = vmatprep.subr.bf16.mxu0 %v360
    %501 = vmatpush1.bf16.msra.mxu0 %v359
    %502 = vmatprep.subr.bf16.mxu0 %v358
    %503 = vmatpush1.bf16.msra.mxu0 %v357
    %504 = vmatprep.subr.bf16.mxu0 %v356
    %505 = vmatpush1.bf16.msra.mxu0 %v355
    %506 = vmatprep.subr.bf16.mxu0 %v354
    %507 = vmatpush1.bf16.msra.mxu0 %v353
    %508 = vmatprep.subr.bf16.mxu0 %v384
    %509 = vmatpush2.bf16.msra.mxu0 %v383
    %510 = vmatprep.subr.bf16.mxu0 %v382
    %511 = vmatpush2.bf16.msra.mxu0 %v381
    %512 = vmatprep.subr.bf16.mxu0 %v380
    %513 = vmatpush2.bf16.msra.mxu0 %v379
    %514 = vmatprep.subr.bf16.mxu0 %v378
    %515 = vmatpush2.bf16.msra.mxu0 %v377
    %516 = vmatprep.subr.bf16.mxu0 %v376
    %517 = vmatpush2.bf16.msra.mxu0 %v375
    %518 = vmatprep.subr.bf16.mxu0 %v374
    %519 = vmatpush2.bf16.msra.mxu0 %v373
    %520 = vmatprep.subr.bf16.mxu0 %v372
    %521 = vmatpush2.bf16.msra.mxu0 %v371
    %522 = vmatprep.subr.bf16.mxu0 %v370
    %523 = vmatpush2.bf16.msra.mxu0 %v369
    %524 = vmatprep.mubr.bf16.mxu0 %v124
    %525 = vmatmul.mubr.bf16.gmra.mxu0 %v123
    %v526 = vpop.f32.mrf.mxu0
    %v527 = vadd.f32 %v484, %v526
    %v528 = vpop.f32.mrf.mxu0
    %v529 = vadd.f32 %v486, %v528
    %v530 = vpop.f32.mrf.mxu0
    %v531 = vadd.f32 %v488, %v530
    %v532 = vpop.f32.mrf.mxu0
    %v533 = vadd.f32 %v490, %v532
    %534 = vdwg.mxu0
    %v535 = vpack.c.bf16 %v531, %v527
    %v536 = vpack.c.bf16 %v533, %v529
    %v537 = vmul.bf16 %v535, 1056980736
    %v538 = vmul.bf16 %v536, 1056980736
    %v539 = vmul.bf16 %v535, 1062879066
    %v540 = vmul.bf16 %v536, 1062879066
    %v541 = vtanh.bf16.pop %v539
    %v542 = vtanh.bf16.pop %v540
    %v543 = vmul.bf16 %v537, %v541
    %v544 = vmul.bf16 %v538, %v542
    %v545 = vadd.bf16 %v543, %v537
    %v546 = vadd.bf16 %v544, %v538
    %v547 = vld [vmem:[%s3] sm:$0xff]
    %v548 = vld [vmem:[%s3 + $0x8] sm:$0xff]
    %v549 = vld [vmem:[%s3 + $0x10] sm:$0xff]
    %v550 = vld [vmem:[%s3 + $0x18] sm:$0xff]
    %v551 = vld [vmem:[%s3 + $0x20] sm:$0xff]
    %v552 = vld [vmem:[%s3 + $0x28] sm:$0xff]
    %v553 = vld [vmem:[%s3 + $0x30] sm:$0xff]
    %v554 = vld [vmem:[%s3 + $0x38] sm:$0xff]
    %v555 = vld [vmem:[%s3 + $0x40] sm:$0xff]
    %v556 = vld [vmem:[%s3 + $0x48] sm:$0xff]
    %v557 = vld [vmem:[%s3 + $0x50] sm:$0xff]
    %v558 = vld [vmem:[%s3 + $0x58] sm:$0xff]
    %v559 = vld [vmem:[%s3 + $0x60] sm:$0xff]
    %v560 = vld [vmem:[%s3 + $0x68] sm:$0xff]
    %v561 = vld [vmem:[%s3 + $0x70] sm:$0xff]
    %v562 = vld [vmem:[%s3 + $0x78] sm:$0xff]
    %v563 = vld [vmem:[%s3 + $0x80] sm:$0xff]
    %v564 = vld [vmem:[%s3 + $0x88] sm:$0xff]
    %v565 = vld [vmem:[%s3 + $0x90] sm:$0xff]
    %v566 = vld [vmem:[%s3 + $0x98] sm:$0xff]
    %v567 = vld [vmem:[%s3 + $0xa0] sm:$0xff]
    %v568 = vld [vmem:[%s3 + $0xa8] sm:$0xff]
    %v569 = vld [vmem:[%s3 + $0xb0] sm:$0xff]
    %v570 = vld [vmem:[%s3 + $0xb8] sm:$0xff]
    %v571 = vld [vmem:[%s3 + $0xc0] sm:$0xff]
    %v572 = vld [vmem:[%s3 + $0xc8] sm:$0xff]
    %v573 = vld [vmem:[%s3 + $0xd0] sm:$0xff]
    %v574 = vld [vmem:[%s3 + $0xd8] sm:$0xff]
    %v575 = vld [vmem:[%s3 + $0xe0] sm:$0xff]
    %v576 = vld [vmem:[%s3 + $0xe8] sm:$0xff]
    %v577 = vld [vmem:[%s3 + $0xf0] sm:$0xff]
    %v578 = vld [vmem:[%s3 + $0xf8] sm:$0xff]
    %v579 = vld [vmem:[%s4] sm:$0x3]
    %v581 = vlaneseq
    %v582 = vshrl.u32 %v581, 7
    %v583 = vsub.s32 0, %v582
    %v584 = vrot.slane %v579, %v583
    %v585 = vlaneseq
    %v586 = vshrl.u32 %v585, 7
    %v587 = vsub.s32 1, %v586
    %v588 = vrot.slane %v579, %v587
    %v623 = vunpack.c.l.b16 %v547
    %v624 = vunpack.c.h.b16 %v547
    %v625 = vunpack.c.l.b16 %v548
    %v626 = vunpack.c.h.b16 %v548
    %v627 = vunpack.c.l.b16 %v549
    %v628 = vunpack.c.h.b16 %v549
    %v629 = vunpack.c.l.b16 %v550
    %v630 = vunpack.c.h.b16 %v550
    %v631 = vunpack.c.l.b16 %v551
    %v632 = vunpack.c.h.b16 %v551
    %v633 = vunpack.c.l.b16 %v552
    %v634 = vunpack.c.h.b16 %v552
    %v635 = vunpack.c.l.b16 %v553
    %v636 = vunpack.c.h.b16 %v553
    %v637 = vunpack.c.l.b16 %v554
    %v638 = vunpack.c.h.b16 %v554
    %v639 = vunpack.c.l.b16 %v555
    %v640 = vunpack.c.h.b16 %v555
    %v641 = vunpack.c.l.b16 %v556
    %v642 = vunpack.c.h.b16 %v556
    %v643 = vunpack.c.l.b16 %v557
    %v644 = vunpack.c.h.b16 %v557
    %v645 = vunpack.c.l.b16 %v558
    %v646 = vunpack.c.h.b16 %v558
    %v647 = vunpack.c.l.b16 %v559
    %v648 = vunpack.c.h.b16 %v559
    %v649 = vunpack.c.l.b16 %v560
    %v650 = vunpack.c.h.b16 %v560
    %v651 = vunpack.c.l.b16 %v561
    %v652 = vunpack.c.h.b16 %v561
    %v653 = vunpack.c.l.b16 %v562
    %v654 = vunpack.c.h.b16 %v562
    %v655 = vunpack.c.l.b16 %v563
    %v656 = vunpack.c.h.b16 %v563
    %v657 = vunpack.c.l.b16 %v564
    %v658 = vunpack.c.h.b16 %v564
    %v659 = vunpack.c.l.b16 %v565
    %v660 = vunpack.c.h.b16 %v565
    %v661 = vunpack.c.l.b16 %v566
    %v662 = vunpack.c.h.b16 %v566
    %v663 = vunpack.c.l.b16 %v567
    %v664 = vunpack.c.h.b16 %v567
    %v665 = vunpack.c.l.b16 %v568
    %v666 = vunpack.c.h.b16 %v568
    %v667 = vunpack.c.l.b16 %v569
    %v668 = vunpack.c.h.b16 %v569
    %v669 = vunpack.c.l.b16 %v570
    %v670 = vunpack.c.h.b16 %v570
    %v671 = vunpack.c.l.b16 %v571
    %v672 = vunpack.c.h.b16 %v571
    %v673 = vunpack.c.l.b16 %v572
    %v674 = vunpack.c.h.b16 %v572
    %v675 = vunpack.c.l.b16 %v573
    %v676 = vunpack.c.h.b16 %v573
    %v677 = vunpack.c.l.b16 %v574
    %v678 = vunpack.c.h.b16 %v574
    %v679 = vunpack.c.l.b16 %v575
    %v680 = vunpack.c.h.b16 %v575
    %v681 = vunpack.c.l.b16 %v576
    %v682 = vunpack.c.h.b16 %v576
    %v683 = vunpack.c.l.b16 %v577
    %v684 = vunpack.c.h.b16 %v577
    %v685 = vunpack.c.l.b16 %v578
    %v686 = vunpack.c.h.b16 %v578
    %v687 = vpack.c.b16 %v625, %v623
    %v688 = vpack.c.b16 %v626, %v624
    %v689 = vpack.c.b16 %v629, %v627
    %v690 = vpack.c.b16 %v630, %v628
    %v691 = vpack.c.b16 %v633, %v631
    %v692 = vpack.c.b16 %v634, %v632
    %v693 = vpack.c.b16 %v637, %v635
    %v694 = vpack.c.b16 %v638, %v636
    %v695 = vpack.c.b16 %v641, %v639
    %v696 = vpack.c.b16 %v642, %v640
    %v697 = vpack.c.b16 %v645, %v643
    %v698 = vpack.c.b16 %v646, %v644
    %v699 = vpack.c.b16 %v649, %v647
    %v700 = vpack.c.b16 %v650, %v648
    %v701 = vpack.c.b16 %v653, %v651
    %v702 = vpack.c.b16 %v654, %v652
    %v703 = vpack.c.b16 %v657, %v655
    %v704 = vpack.c.b16 %v658, %v656
    %v705 = vpack.c.b16 %v661, %v659
    %v706 = vpack.c.b16 %v662, %v660
    %v707 = vpack.c.b16 %v665, %v663
    %v708 = vpack.c.b16 %v666, %v664
    %v709 = vpack.c.b16 %v669, %v667
    %v710 = vpack.c.b16 %v670, %v668
    %v711 = vpack.c.b16 %v673, %v671
    %v712 = vpack.c.b16 %v674, %v672
    %v713 = vpack.c.b16 %v677, %v675
    %v714 = vpack.c.b16 %v678, %v676
    %v715 = vpack.c.b16 %v681, %v679
    %v716 = vpack.c.b16 %v682, %v680
    %v717 = vpack.c.b16 %v685, %v683
    %v718 = vpack.c.b16 %v686, %v684
    %751 = vmatprep.subr.bf16.mxu0 %v702
    %752 = vmatpush1.bf16.msra.mxu0 %v701
    %753 = vmatprep.subr.bf16.mxu0 %v700
    %754 = vmatpush1.bf16.msra.mxu0 %v699
    %755 = vmatprep.subr.bf16.mxu0 %v698
    %756 = vmatpush1.bf16.msra.mxu0 %v697
    %757 = vmatprep.subr.bf16.mxu0 %v696
    %758 = vmatpush1.bf16.msra.mxu0 %v695
    %759 = vmatprep.subr.bf16.mxu0 %v694
    %760 = vmatpush1.bf16.msra.mxu0 %v693
    %761 = vmatprep.subr.bf16.mxu0 %v692
    %762 = vmatpush1.bf16.msra.mxu0 %v691
    %763 = vmatprep.subr.bf16.mxu0 %v690
    %764 = vmatpush1.bf16.msra.mxu0 %v689
    %765 = vmatprep.subr.bf16.mxu0 %v688
    %766 = vmatpush1.bf16.msra.mxu0 %v687
    %767 = vmatprep.subr.bf16.mxu0 %v718
    %768 = vmatpush2.bf16.msra.mxu0 %v717
    %769 = vmatprep.subr.bf16.mxu0 %v716
    %770 = vmatpush2.bf16.msra.mxu0 %v715
    %771 = vmatprep.subr.bf16.mxu0 %v714
    %772 = vmatpush2.bf16.msra.mxu0 %v713
    %773 = vmatprep.subr.bf16.mxu0 %v712
    %774 = vmatpush2.bf16.msra.mxu0 %v711
    %775 = vmatprep.subr.bf16.mxu0 %v710
    %776 = vmatpush2.bf16.msra.mxu0 %v709
    %777 = vmatprep.subr.bf16.mxu0 %v708
    %778 = vmatpush2.bf16.msra.mxu0 %v707
    %779 = vmatprep.subr.bf16.mxu0 %v706
    %780 = vmatpush2.bf16.msra.mxu0 %v705
    %781 = vmatprep.subr.bf16.mxu0 %v704
    %782 = vmatpush2.bf16.msra.mxu0 %v703
    %783 = vmatprep.mubr.bf16.mxu0 %v546
    %784 = vmatmul.mubr.bf16.gmra.mxu0 %v545
    %v785 = vpop.f32.mrf.mxu0
    %v786 = vadd.f32 %v584, %v785
    %v787 = vpop.f32.mrf.mxu0
    %v788 = vadd.f32 %v588, %v787
    %v789 = vpop.f32.mrf.mxu0
    %v790 = vadd.f32 %v584, %v789
    %v791 = vpop.f32.mrf.mxu0
    %v792 = vadd.f32 %v588, %v791
    %793 = vdwg.mxu0
    %v794 = vpack.c.bf16 %v790, %v786
    %v795 = vpack.c.bf16 %v792, %v788
    %v796 = vmul.bf16 %v794, 1056980736
    %v797 = vmul.bf16 %v795, 1056980736
    %v798 = vmul.bf16 %v794, 1062879066
    %v799 = vmul.bf16 %v795, 1062879066
    %v800 = vtanh.bf16.pop %v798
    %v801 = vtanh.bf16.pop %v799
    %v802 = vmul.bf16 %v796, %v800
    %v803 = vmul.bf16 %v797, %v801
    %v804 = vadd.bf16 %v802, %v796
    %v805 = vadd.bf16 %v803, %v797
    %v806 = vadd.bf16 %v804, %v545
    %v807 = vadd.bf16 %v805, %v546
    %v808 = vld [vmem:[%s5] sm:$0xff]
    %v809 = vld [vmem:[%s5 + $0x8] sm:$0xff]
    %v810 = vld [vmem:[%s5 + $0x10] sm:$0xff]
    %v811 = vld [vmem:[%s5 + $0x18] sm:$0xff]
    %v812 = vld [vmem:[%s5 + $0x20] sm:$0xff]
    %v813 = vld [vmem:[%s5 + $0x28] sm:$0xff]
    %v814 = vld [vmem:[%s5 + $0x30] sm:$0xff]
    %v815 = vld [vmem:[%s5 + $0x38] sm:$0xff]
    %v816 = vld [vmem:[%s5 + $0x40] sm:$0xff]
    %v817 = vld [vmem:[%s5 + $0x48] sm:$0xff]
    %v818 = vld [vmem:[%s5 + $0x50] sm:$0xff]
    %v819 = vld [vmem:[%s5 + $0x58] sm:$0xff]
    %v820 = vld [vmem:[%s5 + $0x60] sm:$0xff]
    %v821 = vld [vmem:[%s5 + $0x68] sm:$0xff]
    %v822 = vld [vmem:[%s5 + $0x70] sm:$0xff]
    %v823 = vld [vmem:[%s5 + $0x78] sm:$0xff]
    %v824 = vld [vmem:[%s5 + $0x80] sm:$0xff]
    %v825 = vld [vmem:[%s5 + $0x88] sm:$0xff]
    %v826 = vld [vmem:[%s5 + $0x90] sm:$0xff]
    %v827 = vld [vmem:[%s5 + $0x98] sm:$0xff]
    %v828 = vld [vmem:[%s5 + $0xa0] sm:$0xff]
    %v829 = vld [vmem:[%s5 + $0xa8] sm:$0xff]
    %v830 = vld [vmem:[%s5 + $0xb0] sm:$0xff]
    %v831 = vld [vmem:[%s5 + $0xb8] sm:$0xff]
    %v832 = vld [vmem:[%s5 + $0xc0] sm:$0xff]
    %v833 = vld [vmem:[%s5 + $0xc8] sm:$0xff]
    %v834 = vld [vmem:[%s5 + $0xd0] sm:$0xff]
    %v835 = vld [vmem:[%s5 + $0xd8] sm:$0xff]
    %v836 = vld [vmem:[%s5 + $0xe0] sm:$0xff]
    %v837 = vld [vmem:[%s5 + $0xe8] sm:$0xff]
    %v838 = vld [vmem:[%s5 + $0xf0] sm:$0xff]
    %v839 = vld [vmem:[%s5 + $0xf8] sm:$0xff]
    %v840 = vld [vmem:[%s5 + $0x100] sm:$0xff]
    %v841 = vld [vmem:[%s5 + $0x108] sm:$0xff]
    %v842 = vld [vmem:[%s5 + $0x110] sm:$0xff]
    %v843 = vld [vmem:[%s5 + $0x118] sm:$0xff]
    %v844 = vld [vmem:[%s5 + $0x120] sm:$0xff]
    %v845 = vld [vmem:[%s5 + $0x128] sm:$0xff]
    %v846 = vld [vmem:[%s5 + $0x130] sm:$0xff]
    %v847 = vld [vmem:[%s5 + $0x138] sm:$0xff]
    %v848 = vld [vmem:[%s5 + $0x140] sm:$0xff]
    %v849 = vld [vmem:[%s5 + $0x148] sm:$0xff]
    %v850 = vld [vmem:[%s5 + $0x150] sm:$0xff]
    %v851 = vld [vmem:[%s5 + $0x158] sm:$0xff]
    %v852 = vld [vmem:[%s5 + $0x160] sm:$0xff]
    %v853 = vld [vmem:[%s5 + $0x168] sm:$0xff]
    %v854 = vld [vmem:[%s5 + $0x170] sm:$0xff]
    %v855 = vld [vmem:[%s5 + $0x178] sm:$0xff]
    %v856 = vld [vmem:[%s5 + $0x180] sm:$0xff]
    %v857 = vld [vmem:[%s5 + $0x188] sm:$0xff]
    %v858 = vld [vmem:[%s5 + $0x190] sm:$0xff]
    %v859 = vld [vmem:[%s5 + $0x198] sm:$0xff]
    %v860 = vld [vmem:[%s5 + $0x1a0] sm:$0xff]
    %v861 = vld [vmem:[%s5 + $0x1a8] sm:$0xff]
    %v862 = vld [vmem:[%s5 + $0x1b0] sm:$0xff]
    %v863 = vld [vmem:[%s5 + $0x1b8] sm:$0xff]
    %v864 = vld [vmem:[%s5 + $0x1c0] sm:$0xff]
    %v865 = vld [vmem:[%s5 + $0x1c8] sm:$0xff]
    %v866 = vld [vmem:[%s5 + $0x1d0] sm:$0xff]
    %v867 = vld [vmem:[%s5 + $0x1d8] sm:$0xff]
    %v868 = vld [vmem:[%s5 + $0x1e0] sm:$0xff]
    %v869 = vld [vmem:[%s5 + $0x1e8] sm:$0xff]
    %v870 = vld [vmem:[%s5 + $0x1f0] sm:$0xff]
    %v871 = vld [vmem:[%s5 + $0x1f8] sm:$0xff]
    %v872 = vld [vmem:[%s6] sm:$0xf]
    %v874 = vlaneseq
    %v875 = vshrl.u32 %v874, 7
    %v876 = vsub.s32 0, %v875
    %v877 = vrot.slane %v872, %v876
    %v878 = vlaneseq
    %v879 = vshrl.u32 %v878, 7
    %v880 = vsub.s32 1, %v879
    %v881 = vrot.slane %v872, %v880
    %v882 = vlaneseq
    %v883 = vshrl.u32 %v882, 7
    %v884 = vsub.s32 2, %v883
    %v885 = vrot.slane %v872, %v884
    %v886 = vlaneseq
    %v887 = vshrl.u32 %v886, 7
    %v888 = vsub.s32 3, %v887
    %v889 = vrot.slane %v872, %v888
    %v958 = vunpack.c.l.b16 %v808
    %v959 = vunpack.c.h.b16 %v808
    %v960 = vunpack.c.l.b16 %v809
    %v961 = vunpack.c.h.b16 %v809
    %v962 = vunpack.c.l.b16 %v810
    %v963 = vunpack.c.h.b16 %v810
    %v964 = vunpack.c.l.b16 %v811
    %v965 = vunpack.c.h.b16 %v811
    %v966 = vunpack.c.l.b16 %v812
    %v967 = vunpack.c.h.b16 %v812
    %v968 = vunpack.c.l.b16 %v813
    %v969 = vunpack.c.h.b16 %v813
    %v970 = vunpack.c.l.b16 %v814
    %v971 = vunpack.c.h.b16 %v814
    %v972 = vunpack.c.l.b16 %v815
    %v973 = vunpack.c.h.b16 %v815
    %v974 = vunpack.c.l.b16 %v816
    %v975 = vunpack.c.h.b16 %v816
    %v976 = vunpack.c.l.b16 %v817
    %v977 = vunpack.c.h.b16 %v817
    %v978 = vunpack.c.l.b16 %v818
    %v979 = vunpack.c.h.b16 %v818
    %v980 = vunpack.c.l.b16 %v819
    %v981 = vunpack.c.h.b16 %v819
    %v982 = vunpack.c.l.b16 %v820
    %v983 = vunpack.c.h.b16 %v820
    %v984 = vunpack.c.l.b16 %v821
    %v985 = vunpack.c.h.b16 %v821
    %v986 = vunpack.c.l.b16 %v822
    %v987 = vunpack.c.h.b16 %v822
    %v988 = vunpack.c.l.b16 %v823
    %v989 = vunpack.c.h.b16 %v823
    %v990 = vunpack.c.l.b16 %v824
    %v991 = vunpack.c.h.b16 %v824
    %v992 = vunpack.c.l.b16 %v825
    %v993 = vunpack.c.h.b16 %v825
    %v994 = vunpack.c.l.b16 %v826
    %v995 = vunpack.c.h.b16 %v826
    %v996 = vunpack.c.l.b16 %v827
    %v997 = vunpack.c.h.b16 %v827
    %v998 = vunpack.c.l.b16 %v828
    %v999 = vunpack.c.h.b16 %v828
    %v1000 = vunpack.c.l.b16 %v829
    %v1001 = vunpack.c.h.b16 %v829
    %v1002 = vunpack.c.l.b16 %v830
    %v1003 = vunpack.c.h.b16 %v830
    %v1004 = vunpack.c.l.b16 %v831
    %v1005 = vunpack.c.h.b16 %v831
    %v1006 = vunpack.c.l.b16 %v832
    %v1007 = vunpack.c.h.b16 %v832
    %v1008 = vunpack.c.l.b16 %v833
    %v1009 = vunpack.c.h.b16 %v833
    %v1010 = vunpack.c.l.b16 %v834
    %v1011 = vunpack.c.h.b16 %v834
    %v1012 = vunpack.c.l.b16 %v835
    %v1013 = vunpack.c.h.b16 %v835
    %v1014 = vunpack.c.l.b16 %v836
    %v1015 = vunpack.c.h.b16 %v836
    %v1016 = vunpack.c.l.b16 %v837
    %v1017 = vunpack.c.h.b16 %v837
    %v1018 = vunpack.c.l.b16 %v838
    %v1019 = vunpack.c.h.b16 %v838
    %v1020 = vunpack.c.l.b16 %v839
    %v1021 = vunpack.c.h.b16 %v839
    %v1022 = vunpack.c.l.b16 %v840
    %v1023 = vunpack.c.h.b16 %v840
    %v1024 = vunpack.c.l.b16 %v841
    %v1025 = vunpack.c.h.b16 %v841
    %v1026 = vunpack.c.l.b16 %v842
    %v1027 = vunpack.c.h.b16 %v842
    %v1028 = vunpack.c.l.b16 %v843
    %v1029 = vunpack.c.h.b16 %v843
    %v1030 = vunpack.c.l.b16 %v844
    %v1031 = vunpack.c.h.b16 %v844
    %v1032 = vunpack.c.l.b16 %v845
    %v1033 = vunpack.c.h.b16 %v845
    %v1034 = vunpack.c.l.b16 %v846
    %v1035 = vunpack.c.h.b16 %v846
    %v1036 = vunpack.c.l.b16 %v847
    %v1037 = vunpack.c.h.b16 %v847
    %v1038 = vunpack.c.l.b16 %v848
    %v1039 = vunpack.c.h.b16 %v848
    %v1040 = vunpack.c.l.b16 %v849
    %v1041 = vunpack.c.h.b16 %v849
    %v1042 = vunpack.c.l.b16 %v850
    %v1043 = vunpack.c.h.b16 %v850
    %v1044 = vunpack.c.l.b16 %v851
    %v1045 = vunpack.c.h.b16 %v851
    %v1046 = vunpack.c.l.b16 %v852
    %v1047 = vunpack.c.h.b16 %v852
    %v1048 = vunpack.c.l.b16 %v853
    %v1049 = vunpack.c.h.b16 %v853
    %v1050 = vunpack.c.l.b16 %v854
    %v1051 = vunpack.c.h.b16 %v854
    %v1052 = vunpack.c.l.b16 %v855
    %v1053 = vunpack.c.h.b16 %v855
    %v1054 = vunpack.c.l.b16 %v856
    %v1055 = vunpack.c.h.b16 %v856
    %v1056 = vunpack.c.l.b16 %v857
    %v1057 = vunpack.c.h.b16 %v857
    %v1058 = vunpack.c.l.b16 %v858
    %v1059 = vunpack.c.h.b16 %v858
    %v1060 = vunpack.c.l.b16 %v859
    %v1061 = vunpack.c.h.b16 %v859
    %v1062 = vunpack.c.l.b16 %v860
    %v1063 = vunpack.c.h.b16 %v860
    %v1064 = vunpack.c.l.b16 %v861
    %v1065 = vunpack.c.h.b16 %v861
    %v1066 = vunpack.c.l.b16 %v862
    %v1067 = vunpack.c.h.b16 %v862
    %v1068 = vunpack.c.l.b16 %v863
    %v1069 = vunpack.c.h.b16 %v863
    %v1070 = vunpack.c.l.b16 %v864
    %v1071 = vunpack.c.h.b16 %v864
    %v1072 = vunpack.c.l.b16 %v865
    %v1073 = vunpack.c.h.b16 %v865
    %v1074 = vunpack.c.l.b16 %v866
    %v1075 = vunpack.c.h.b16 %v866
    %v1076 = vunpack.c.l.b16 %v867
    %v1077 = vunpack.c.h.b16 %v867
    %v1078 = vunpack.c.l.b16 %v868
    %v1079 = vunpack.c.h.b16 %v868
    %v1080 = vunpack.c.l.b16 %v869
    %v1081 = vunpack.c.h.b16 %v869
    %v1082 = vunpack.c.l.b16 %v870
    %v1083 = vunpack.c.h.b16 %v870
    %v1084 = vunpack.c.l.b16 %v871
    %v1085 = vunpack.c.h.b16 %v871
    %v1086 = vpack.c.b16 %v962, %v958
    %v1087 = vpack.c.b16 %v963, %v959
    %v1088 = vpack.c.b16 %v964, %v960
    %v1089 = vpack.c.b16 %v965, %v961
    %v1090 = vpack.c.b16 %v970, %v966
    %v1091 = vpack.c.b16 %v971, %v967
    %v1092 = vpack.c.b16 %v972, %v968
    %v1093 = vpack.c.b16 %v973, %v969
    %v1094 = vpack.c.b16 %v978, %v974
    %v1095 = vpack.c.b16 %v979, %v975
    %v1096 = vpack.c.b16 %v980, %v976
    %v1097 = vpack.c.b16 %v981, %v977
    %v1098 = vpack.c.b16 %v986, %v982
    %v1099 = vpack.c.b16 %v987, %v983
    %v1100 = vpack.c.b16 %v988, %v984
    %v1101 = vpack.c.b16 %v989, %v985
    %v1102 = vpack.c.b16 %v994, %v990
    %v1103 = vpack.c.b16 %v995, %v991
    %v1104 = vpack.c.b16 %v996, %v992
    %v1105 = vpack.c.b16 %v997, %v993
    %v1106 = vpack.c.b16 %v1002, %v998
    %v1107 = vpack.c.b16 %v1003, %v999
    %v1108 = vpack.c.b16 %v1004, %v1000
    %v1109 = vpack.c.b16 %v1005, %v1001
    %v1110 = vpack.c.b16 %v1010, %v1006
    %v1111 = vpack.c.b16 %v1011, %v1007
    %v1112 = vpack.c.b16 %v1012, %v1008
    %v1113 = vpack.c.b16 %v1013, %v1009
    %v1114 = vpack.c.b16 %v1018, %v1014
    %v1115 = vpack.c.b16 %v1019, %v1015
    %v1116 = vpack.c.b16 %v1020, %v1016
    %v1117 = vpack.c.b16 %v1021, %v1017
    %v1118 = vpack.c.b16 %v1026, %v1022
    %v1119 = vpack.c.b16 %v1027, %v1023
    %v1120 = vpack.c.b16 %v1028, %v1024
    %v1121 = vpack.c.b16 %v1029, %v1025
    %v1122 = vpack.c.b16 %v1034, %v1030
    %v1123 = vpack.c.b16 %v1035, %v1031
    %v1124 = vpack.c.b16 %v1036, %v1032
    %v1125 = vpack.c.b16 %v1037, %v1033
    %v1126 = vpack.c.b16 %v1042, %v1038
    %v1127 = vpack.c.b16 %v1043, %v1039
    %v1128 = vpack.c.b16 %v1044, %v1040
    %v1129 = vpack.c.b16 %v1045, %v1041
    %v1130 = vpack.c.b16 %v1050, %v1046
    %v1131 = vpack.c.b16 %v1051, %v1047
    %v1132 = vpack.c.b16 %v1052, %v1048
    %v1133 = vpack.c.b16 %v1053, %v1049
    %v1134 = vpack.c.b16 %v1058, %v1054
    %v1135 = vpack.c.b16 %v1059, %v1055
    %v1136 = vpack.c.b16 %v1060, %v1056
    %v1137 = vpack.c.b16 %v1061, %v1057
    %v1138 = vpack.c.b16 %v1066, %v1062
    %v1139 = vpack.c.b16 %v1067, %v1063
    %v1140 = vpack.c.b16 %v1068, %v1064
    %v1141 = vpack.c.b16 %v1069, %v1065
    %v1142 = vpack.c.b16 %v1074, %v1070
    %v1143 = vpack.c.b16 %v1075, %v1071
    %v1144 = vpack.c.b16 %v1076, %v1072
    %v1145 = vpack.c.b16 %v1077, %v1073
    %v1146 = vpack.c.b16 %v1082, %v1078
    %v1147 = vpack.c.b16 %v1083, %v1079
    %v1148 = vpack.c.b16 %v1084, %v1080
    %v1149 = vpack.c.b16 %v1085, %v1081
    %1214 = vmatprep.subr.bf16.mxu0 %v1115
    %1215 = vmatpush1.bf16.msra.mxu0 %v1114
    %1216 = vmatprep.subr.bf16.mxu0 %v1111
    %1217 = vmatpush1.bf16.msra.mxu0 %v1110
    %1218 = vmatprep.subr.bf16.mxu0 %v1107
    %1219 = vmatpush1.bf16.msra.mxu0 %v1106
    %1220 = vmatprep.subr.bf16.mxu0 %v1103
    %1221 = vmatpush1.bf16.msra.mxu0 %v1102
    %1222 = vmatprep.subr.bf16.mxu0 %v1099
    %1223 = vmatpush1.bf16.msra.mxu0 %v1098
    %1224 = vmatprep.subr.bf16.mxu0 %v1095
    %1225 = vmatpush1.bf16.msra.mxu0 %v1094
    %1226 = vmatprep.subr.bf16.mxu0 %v1091
    %1227 = vmatpush1.bf16.msra.mxu0 %v1090
    %1228 = vmatprep.subr.bf16.mxu0 %v1087
    %1229 = vmatpush1.bf16.msra.mxu0 %v1086
    %1230 = vmatprep.subr.bf16.mxu0 %v1147
    %1231 = vmatpush2.bf16.msra.mxu0 %v1146
    %1232 = vmatprep.subr.bf16.mxu0 %v1143
    %1233 = vmatpush2.bf16.msra.mxu0 %v1142
    %1234 = vmatprep.subr.bf16.mxu0 %v1139
    %1235 = vmatpush2.bf16.msra.mxu0 %v1138
    %1236 = vmatprep.subr.bf16.mxu0 %v1135
    %1237 = vmatpush2.bf16.msra.mxu0 %v1134
    %1238 = vmatprep.subr.bf16.mxu0 %v1131
    %1239 = vmatpush2.bf16.msra.mxu0 %v1130
    %1240 = vmatprep.subr.bf16.mxu0 %v1127
    %1241 = vmatpush2.bf16.msra.mxu0 %v1126
    %1242 = vmatprep.subr.bf16.mxu0 %v1123
    %1243 = vmatpush2.bf16.msra.mxu0 %v1122
    %1244 = vmatprep.subr.bf16.mxu0 %v1119
    %1245 = vmatpush2.bf16.msra.mxu0 %v1118
    %1246 = vmatprep.mubr.bf16.mxu0 %v807
    %1247 = vmatmul.mubr.bf16.gmra.mxu0 %v806
    %v1248 = vpop.f32.mrf.mxu0
    %v1249 = vadd.f32 %v877, %v1248
    %v1250 = vpop.f32.mrf.mxu0
    %v1251 = vadd.f32 %v881, %v1250
    %v1252 = vpop.f32.mrf.mxu0
    %v1253 = vadd.f32 %v877, %v1252
    %v1254 = vpop.f32.mrf.mxu0
    %v1255 = vadd.f32 %v881, %v1254
    %1256 = vdwg.mxu0
    %1257 = vmatprep.subr.bf16.mxu0 %v1117
    %1258 = vmatpush1.bf16.msra.mxu0 %v1116
    %1259 = vmatprep.subr.bf16.mxu0 %v1113
    %1260 = vmatpush1.bf16.msra.mxu0 %v1112
    %1261 = vmatprep.subr.bf16.mxu0 %v1109
    %1262 = vmatpush1.bf16.msra.mxu0 %v1108
    %1263 = vmatprep.subr.bf16.mxu0 %v1105
    %1264 = vmatpush1.bf16.msra.mxu0 %v1104
    %1265 = vmatprep.subr.bf16.mxu0 %v1101
    %1266 = vmatpush1.bf16.msra.mxu0 %v1100
    %1267 = vmatprep.subr.bf16.mxu0 %v1097
    %1268 = vmatpush1.bf16.msra.mxu0 %v1096
    %1269 = vmatprep.subr.bf16.mxu0 %v1093
    %1270 = vmatpush1.bf16.msra.mxu0 %v1092
    %1271 = vmatprep.subr.bf16.mxu0 %v1089
    %1272 = vmatpush1.bf16.msra.mxu0 %v1088
    %1273 = vmatprep.subr.bf16.mxu0 %v1149
    %1274 = vmatpush2.bf16.msra.mxu0 %v1148
    %1275 = vmatprep.subr.bf16.mxu0 %v1145
    %1276 = vmatpush2.bf16.msra.mxu0 %v1144
    %1277 = vmatprep.subr.bf16.mxu0 %v1141
    %1278 = vmatpush2.bf16.msra.mxu0 %v1140
    %1279 = vmatprep.subr.bf16.mxu0 %v1137
    %1280 = vmatpush2.bf16.msra.mxu0 %v1136
    %1281 = vmatprep.subr.bf16.mxu0 %v1133
    %1282 = vmatpush2.bf16.msra.mxu0 %v1132
    %1283 = vmatprep.subr.bf16.mxu0 %v1129
    %1284 = vmatpush2.bf16.msra.mxu0 %v1128
    %1285 = vmatprep.subr.bf16.mxu0 %v1125
    %1286 = vmatpush2.bf16.msra.mxu0 %v1124
    %1287 = vmatprep.subr.bf16.mxu0 %v1121
    %1288 = vmatpush2.bf16.msra.mxu0 %v1120
    %1289 = vmatprep.mubr.bf16.mxu0 %v807
    %1290 = vmatmul.mubr.bf16.gmra.mxu0 %v806
    %v1291 = vpop.f32.mrf.mxu0
    %v1292 = vadd.f32 %v885, %v1291
    %v1293 = vpop.f32.mrf.mxu0
    %v1294 = vadd.f32 %v889, %v1293
    %v1295 = vpop.f32.mrf.mxu0
    %v1296 = vadd.f32 %v885, %v1295
    %v1297 = vpop.f32.mrf.mxu0
    %v1298 = vadd.f32 %v889, %v1297
    %1299 = vdwg.mxu0
    %v1300 = vpack.c.bf16 %v1253, %v1249
    %v1301 = vpack.c.bf16 %v1255, %v1251
    %v1302 = vpack.c.bf16 %v1296, %v1292
    %v1303 = vpack.c.bf16 %v1298, %v1294
    %v1304 = vmul.bf16 %v1300, 1056980736
    %v1305 = vmul.bf16 %v1301, 1056980736
    %v1306 = vmul.bf16 %v1302, 1056980736
    %v1307 = vmul.bf16 %v1303, 1056980736
    %v1308 = vmul.bf16 %v1300, 1062879066
    %v1309 = vmul.bf16 %v1301, 1062879066
    %v1310 = vmul.bf16 %v1302, 1062879066
    %v1311 = vmul.bf16 %v1303, 1062879066
    %v1312 = vtanh.bf16.pop %v1308
    %v1313 = vtanh.bf16.pop %v1309
    %v1314 = vtanh.bf16.pop %v1310
    %v1315 = vtanh.bf16.pop %v1311
    %v1316 = vmul.bf16 %v1304, %v1312
    %v1317 = vmul.bf16 %v1305, %v1313
    %v1318 = vmul.bf16 %v1306, %v1314
    %v1319 = vmul.bf16 %v1307, %v1315
    %v1320 = vadd.bf16 %v1316, %v1304
    %v1321 = vadd.bf16 %v1317, %v1305
    %v1322 = vadd.bf16 %v1318, %v1306
    %v1323 = vadd.bf16 %v1319, %v1307
    %v1328 = vunpack.c.l.b16 %v1320
    %v1329 = vunpack.c.l.b16 %v1321
    %v1330 = vunpack.c.l.b16 %v1322
    %v1331 = vunpack.c.l.b16 %v1323
    %v1332 = vunpack.c.h.b16 %v1320
    %v1333 = vunpack.c.h.b16 %v1321
    %v1334 = vunpack.c.h.b16 %v1322
    %v1335 = vunpack.c.h.b16 %v1323
    %v1336 = vpack.c.b16 %v1329, %v1328
    %v1337 = vpack.c.b16 %v1331, %v1330
    %v1338 = vpack.c.b16 %v1333, %v1332
    %v1339 = vpack.c.b16 %v1335, %v1334
    %1344 = vst [vmem:[#allocation2] sm:$0xff] %v1336
    %1345 = vst [vmem:[#allocation2 + $0x8] sm:$0xff] %v1337
    %1346 = vst [vmem:[#allocation2 + $0x10] sm:$0xff] %v1338
    %1347 = vst [vmem:[#allocation2 + $0x18] sm:$0xff] %v1339
    // Predicated region
    $region30: #{umlp_forward.1} parent=1 // pred_check
      _
    $region31: #{umlp_forward.1} parent=1 // pred_check_branch
      %1349 = sbr.rel (0) target = $region33
    $region32: #{umlp_forward.1} parent=1 // pred_region
      %s1351 = ssub.s32 512, 512
      %1352 = vsyncadd [#allocation3], %s1351
      %s1353 = sshll.u32 [#allocation2], 4
      %s1354 = int_to_ptr.vmem [resolvable:$true] %s1353
      %1359 = dma.vmem_to_hbm [thread:$0]  %s1354, 512, %s7, [#allocation3], 256, 256, 16
    $region33: #{umlp_forward.1} parent=1 // pred_fallthru
      _
    // Predicated region
    $region34: #{umlp_forward.1} parent=1 // pred_check
      _
    $region35: #{umlp_forward.1} parent=1 // pred_check_branch
      %1361 = sbr.rel (0) target = $region37
    $region36: #{umlp_forward.1} parent=1 // pred_region
      %1362 = dma.done [#allocation3], 512
    $region37: #{umlp_forward.1} parent=1 // pred_fallthru
      _
    %1363 = vsyncpa [#allocation3], 1

</llo_original>
